<compile_context>
chip_gen: v6e
topology: v6e:2x2x1
jax: 0.10.0
libtpu: 0.0.40
codegen_flags: <defaults>
</compile_context>

<pallas_src>
import numpy as np
import jax
import jax.numpy as jnp
from jax.experimental import pallas as pl
from jax.experimental.pallas import tpu as pltpu

LANES = 128          # vreg lane width: last dim of every block
MAX_ROW_TILE = 512   # 512 x 128 x 4 B = 256 KiB per f32 block -> well under VMEM on v5e/v6e/v7x


# ---------------------------------------------------------------------------
# Pallas kernel: tiled identity copy (lane-dense blocks)
# ---------------------------------------------------------------------------
def _identity_copy_kernel(x_ref, o_ref):
    o_ref[...] = x_ref[...]


def _pallas_identity_2d(x2d, row_tile):
    rows, lanes = x2d.shape  # rows % row_tile == 0, lanes == LANES
    return pl.pallas_call(
        _identity_copy_kernel,
        out_shape=jax.ShapeDtypeStruct((rows, lanes), x2d.dtype),
        grid=(rows // row_tile,),
        in_specs=[pl.BlockSpec((row_tile, lanes), lambda i: (i, 0))],
        out_specs=pl.BlockSpec((row_tile, lanes), lambda i: (i, 0)),
        compiler_params=pltpu.CompilerParams(
            dimension_semantics=("parallel",)),
    )(x2d)


# ---------------------------------------------------------------------------
# JAX wrapper: flatten -> pad to lane-dense tiles -> copy kernel -> un-pad
# ---------------------------------------------------------------------------
def _inspection_identity(x):
    shape = x.shape
    n = int(np.prod(shape)) if len(shape) > 0 else 1

    rows = -(-n // LANES)                       # ceil(n / 128)
    rows = -(-rows // 8) * 8                    # sublane alignment (multiple of 8)
    row_tile = min(MAX_ROW_TILE, rows)          # big tiles; multiple of 8 by construction
    rows_pad = -(-rows // row_tile) * row_tile  # cdiv-safe: no trailing rows dropped
    total = rows_pad * LANES

    flat = jnp.ravel(x)
    flat = jnp.pad(flat, (0, total - n))
    y2d = _pallas_identity_2d(flat.reshape(rows_pad, LANES), row_tile)
    return y2d.reshape(-1)[:n].reshape(shape)


_inspection_identity_jit = jax.jit(_inspection_identity)


class Inspection:
    """Pallas port of the PyTorch Inspection module (shape-print + identity)."""

    def __init__(self, text: str = ""):
        self.text = text

    def __call__(self, x):
        # Host-side side effect, same as the PyTorch forward. The shape is static,
        # so printing it here is exact.
        # TODO(synk): the print itself has no device-side Pallas equivalent; it is a
        # host side effect and is reproduced on the host, not inside the kernel.
        print(self.text)
        print(x.shape, flush=True)
        return _inspection_identity_jit(x)


if __name__ == "__main__":
    key = jax.random.PRNGKey(0)
    x = jax.random.normal(key, (2, 4, 16, 16), jnp.float32)  # NCHW, like PyTorch

    module = Inspection("inspection: feature map")
    out = module(x)
    out = jax.block_until_ready(out)

    assert out.shape == x.shape and out.dtype == x.dtype, (out.shape, out.dtype)
    np.testing.assert_array_equal(np.asarray(out), np.asarray(x))

    print("KERNEL_OK")
</pallas_src>

<mosaic_0001>
module attributes {stable_mosaic.version = 11 : i64} {
  func.func @_identity_copy_kernel(%arg0: i32, %arg1: memref<16x128xf32, #tpu.memory_space<vmem>>, %arg2: memref<16x128xf32, #tpu.memory_space<vmem>>) attributes {dimension_semantics = [#tpu.dimension_semantics<parallel>], iteration_bounds = array<i64: 1>, scalar_prefetch = 0 : i64, scratch_operands = 0 : i64, tpu.core_type = #tpu.core_type<tc>, window_params = [{transform_indices = @transform_0, window_bounds = array<i64: 16, 128>}, {transform_indices = @transform_1, window_bounds = array<i64: 16, 128>}]} {
    %c0 = arith.constant 0 : index
    %c0_0 = arith.constant 0 : index
    %0 = vector.load %arg1[%c0, %c0_0] : memref<16x128xf32, #tpu.memory_space<vmem>>, vector<16x128xf32>
    %c0_1 = arith.constant 0 : index
    %c0_2 = arith.constant 0 : index
    %1 = vector.load %arg2[%c0_1, %c0_2] : memref<16x128xf32, #tpu.memory_space<vmem>>, vector<16x128xf32>
    tpu.vector_store %arg2[%c0_1, %c0_2], %0 {strides = array<i32>} : memref<16x128xf32, #tpu.memory_space<vmem>>, vector<16x128xf32>,
    return
  }
  func.func @transform_0(%arg0: i32) -> (i32, i32) {
    %c0_i32 = arith.constant 0 : i32
    %c0_i32_0 = arith.constant 0 : i32
    return %arg0, %c0_i32 : i32, i32
  }
  func.func @transform_1(%arg0: i32) -> (i32, i32) {
    %c0_i32 = arith.constant 0 : i32
    %c0_i32_0 = arith.constant 0 : i32
    return %arg0, %c0_i32 : i32, i32
  }
}

</mosaic_0001>

<llo_original>
// kernel: _inspection_identity.1
$region0: #{_inspection_identity.1}
  #allocation0 [shape = 'u32[]', space=smem, size = 0x4, offset = 0x4, fixed_abs, tag = 'smem constant byte address 0x4 - core index']
  #allocation1 [shape = 'u32[144,128]{1,0:T(1,128)}', space=vmem, size = 0x12000, scoped, tag = 'internal scratch']
  %s0 = inlined_call_operand.vmem [shape: f32[16,128], index: 0, kind: input, shape index: {}]
  %s1 = inlined_call_operand.vmem [shape: f32[16,128], index: 1, kind: output, shape index: {}]
  %s2 = sld [smem:[#allocation0]]
  $region14: #{_inspection_identity.1} parent=0
    _
  %s4 = ssub.s32 1, %s2
  %s5 = scalar_select 0, %s4, %s2
  // Predicated region
  $region2: #{_inspection_identity.1} parent=0 // pred_check
    _
  $region3: #{_inspection_identity.1} parent=0 // pred_check_branch
    %7 = sbr.rel (0) target = $region5
  $region4: #{_inspection_identity.1} parent=0 // pred_region
    _
  $region5: #{_inspection_identity.1} parent=0 // pred_fallthru
    _
  %v8 = vld [vmem:[%s0] sm:$0xff]
  %v9 = vld [vmem:[%s0 + $0x8] sm:$0xff]
  %10 = vst [vmem:[%s1] sm:$0xff] %v8
  %11 = vst [vmem:[%s1 + $0x8] sm:$0xff] %v9
  // Predicated region
  $region6: #{_inspection_identity.1} parent=0 // pred_check
    _
  $region7: #{_inspection_identity.1} parent=0 // pred_check_branch
    %13 = sbr.rel (0) target = $region9
  $region8: #{_inspection_identity.1} parent=0 // pred_region
    _
  $region9: #{_inspection_identity.1} parent=0 // pred_fallthru
    _
  // Predicated region
  $region10: #{_inspection_identity.1} parent=0 // pred_check
    _
  $region11: #{_inspection_identity.1} parent=0 // pred_check_branch
    %15 = sbr.rel (0) target = $region13
  $region12: #{_inspection_identity.1} parent=0 // pred_region
    _
  $region13: #{_inspection_identity.1} parent=0 // pred_fallthru
    _

</llo_original>
